<compile_context>
chip_gen: v7x
topology: tpu7x:2x2x1
jax: 0.10.0
libtpu: 0.0.40
codegen_flags: <defaults>
</compile_context>

<pallas_src>
import jax
import jax.numpy as jnp
from jax.experimental import pallas as pl
from jax.experimental.pallas import tpu as pltpu

# ----- config (synthetic, small) -----
B = 8               # batch
T = 8               # sequence length
ENC_LSTM_DIM = 64
OUT_DIM = 2 * ENC_LSTM_DIM          # encoder.out_dim = 128
INPUT_DIM = 4 * OUT_DIM             # 512
FC_DIM = 128
N_CLASSES = 3
N_PAD = 128                         # lane-dense padded logits width
NONLINEAR_FC = False                # classifier = Linear -> Linear -> Linear
TILE_B_MAX = 512                    # batch tile cap (fits default scoped VMEM)


def nli_kernel(s12_ref, w_ref, b_ref, out_ref):
    # s12_ref: (TILE_B, T, 2D) bf16, lane-packed [s1 | s2]
    # token sum-pool, accumulate in f32 (the mean's 1/T is folded into w_ref)
    pooled = jnp.sum(s12_ref[...].astype(jnp.float32), axis=1)       # (TILE_B, 2D) = [su|sv]
    su = pooled[:, :OUT_DIM]
    sv = pooled[:, OUT_DIM:]
    # second K=256 feature panel: [|su - sv| , su * sv]  (128-aligned lane concat)
    feats2 = jnp.concatenate([jnp.abs(su - sv), su * sv], axis=-1)    # (TILE_B, 2D)

    # two K=256 MXU matmuls, bf16 operands, f32 accumulation
    acc = jnp.dot(pooled.astype(jnp.bfloat16), w_ref[0],
                  preferred_element_type=jnp.float32)
    acc = acc + jnp.dot(feats2.astype(jnp.bfloat16), w_ref[1],
                        preferred_element_type=jnp.float32)

    # lane-dense (TILE_B, 128) store; columns >= N_CLASSES are zero (padded W/b)
    out_ref[...] = (acc + b_ref[...]).astype(out_ref.dtype)


def nli_forward(s1, s2, params):
    assert not NONLINEAR_FC, (
        "classifier fold is only valid for the activation-free (nonlinear_fc=False) branch")
    w1, b1, w2, b2, w3, b3 = params
    batch, seq_len, d = s1.shape
    assert d == OUT_DIM and s2.shape == s1.shape

    # ---- fold the activation-free 3-layer classifier into one affine map ----
    w_fold = w1 @ w2 @ w3                              # (4D, N_CLASSES)
    b_fold = b1 @ w2 @ w3 + b2 @ w3 + b3               # (1, N_CLASSES)

    # fold the mean-pool scaling into the weights and split into per-feature panels
    # (row order in w_fold is [u block | v block | |u-v| block | u*v block])
    w_fold = w_fold.reshape(4, OUT_DIM, N_CLASSES)
    scale = jnp.array([1.0, 1.0, 1.0, 1.0 / seq_len], jnp.float32) / seq_len
    w_fold = w_fold * scale[:, None, None]

    # pad logits 3 -> 128 lanes (lane-dense store) and stack into two K=256 panels:
    #   panel 0: [W_u ; W_v]        consumed by [su | sv]
    #   panel 1: [W_|u-v| ; W_u*v]  consumed by [|su-sv| | su*sv]
    w_fold = jnp.pad(w_fold, ((0, 0), (0, 0), (0, N_PAD - N_CLASSES)))
    w_panels = w_fold.reshape(2, 2 * OUT_DIM, N_PAD).astype(jnp.bfloat16)
    b_fold = jnp.pad(b_fold, ((0, 0), (0, N_PAD - N_CLASSES)))        # stays f32

    # pack both sentences on the lane axis; bf16 halves the dominant HBM traffic
    s12 = jnp.concatenate([s1, s2], axis=-1).astype(jnp.bfloat16)     # (B, T, 2D)

    # batch tiling: up to 512 rows per tile; clamp (rounded to a sublane multiple)
    # for small batches.  Double-buffered VMEM at TILE_B=512, T=8:
    #   input 2 MiB x2 + output 256 KiB x2 + weights 128 KiB x2  ~= 4.8 MiB.
    tile_b = min(TILE_B_MAX, max(8, ((batch + 7) // 8) * 8))
    pad_b = (-batch) % tile_b
    if pad_b:
        s12 = jnp.pad(s12, ((0, pad_b), (0, 0), (0, 0)))
    batch_p = batch + pad_b
    grid = (batch_p // tile_b,)

    out_padded = pl.pallas_call(
        nli_kernel,
        out_shape=jax.ShapeDtypeStruct((batch_p, N_PAD), jnp.float32),
        grid_spec=pltpu.PrefetchScalarGridSpec(
            num_scalar_prefetch=0,
            grid=grid,
            in_specs=[
                pl.BlockSpec((tile_b, seq_len, 2 * OUT_DIM), lambda i: (i, 0, 0)),
                pl.BlockSpec((2, 2 * OUT_DIM, N_PAD), lambda i: (0, 0, 0)),  # VMEM-resident
                pl.BlockSpec((1, N_PAD), lambda i: (0, 0)),                  # VMEM-resident
            ],
            out_specs=pl.BlockSpec((tile_b, N_PAD), lambda i: (i, 0)),
        ),
        compiler_params=pltpu.CompilerParams(
            dimension_semantics=("parallel",)),
    )(s12, w_panels, b_fold)

    # drop batch padding and the zero-padded logit lanes
    return out_padded[:batch, :N_CLASSES]


def init_params(key):
    k1, k2, k3 = jax.random.split(key, 3)
    scale = 0.02
    w1 = scale * jax.random.normal(k1, (INPUT_DIM, FC_DIM), jnp.float32)
    b1 = jnp.zeros((1, FC_DIM), jnp.float32)
    w2 = scale * jax.random.normal(k2, (FC_DIM, FC_DIM), jnp.float32)
    b2 = jnp.zeros((1, FC_DIM), jnp.float32)
    w3 = scale * jax.random.normal(k3, (FC_DIM, N_CLASSES), jnp.float32)
    b3 = jnp.zeros((1, N_CLASSES), jnp.float32)
    return (w1, b1, w2, b2, w3, b3)


def reference_forward(s1, s2, params):
    """Pure-JAX f32 reference of the original (unfused) forward pass."""
    w1, b1, w2, b2, w3, b3 = params
    u = jnp.mean(s1, axis=1)
    v = jnp.mean(s2, axis=1)
    feats = jnp.concatenate([u, v, jnp.abs(u - v), u * v], axis=1)
    h1 = feats @ w1 + b1
    h2 = h1 @ w2 + b2
    return h2 @ w3 + b3


if __name__ == "__main__":
    key = jax.random.PRNGKey(0)
    k_s1, k_s2, k_p = jax.random.split(key, 3)

    s1 = jax.random.normal(k_s1, (B, T, OUT_DIM), jnp.float32)
    s2 = jax.random.normal(k_s2, (B, T, OUT_DIM), jnp.float32)
    params = init_params(k_p)

    out = nli_forward(s1, s2, params)
    out = jax.block_until_ready(out)

    ref = reference_forward(s1, s2, params)
    assert out.shape == (B, N_CLASSES)
    # tolerance loosened vs. the pure-f32 version: inputs / MXU operands are bf16
    assert jnp.allclose(out, ref, atol=2e-3, rtol=2e-2), (
        float(jnp.max(jnp.abs(out - ref))))

    print("KERNEL_OK")
</pallas_src>

<mosaic_0001>
module attributes {stable_mosaic.version = 11 : i64} {
  func.func @nli_kernel(%arg0: i32, %arg1: memref<8x8x256xbf16, #tpu.memory_space<vmem>>, %arg2: memref<2x256x128xbf16, #tpu.memory_space<vmem>>, %arg3: memref<1x128xf32, #tpu.memory_space<vmem>>, %arg4: memref<8x128xf32, #tpu.memory_space<vmem>>) attributes {dimension_semantics = [#tpu.dimension_semantics<parallel>], iteration_bounds = array<i64: 1>, scalar_prefetch = 0 : i64, scratch_operands = 0 : i64, tpu.core_type = #tpu.core_type<tc>, window_params = [{transform_indices = @transform_0, window_bounds = array<i64: 8, 8, 256>}, {pipeline_mode = #tpu.pipeline_mode<synchronous>, transform_indices = @transform_1, window_bounds = array<i64: 2, 256, 128>}, {pipeline_mode = #tpu.pipeline_mode<synchronous>, transform_indices = @transform_2, window_bounds = array<i64: 1, 128>}, {transform_indices = @transform_3, window_bounds = array<i64: 8, 128>}]} {
    %c0 = arith.constant 0 : index
    %c0_0 = arith.constant 0 : index
    %c0_1 = arith.constant 0 : index
    %0 = vector.load %arg1[%c0, %c0_0, %c0_1] : memref<8x8x256xbf16, #tpu.memory_space<vmem>>, vector<8x8x256xbf16>
    %1 = arith.extf %0 : vector<8x8x256xbf16> to vector<8x8x256xf32>
    %cst = arith.constant dense<0.000000e+00> : vector<8x256xf32>
    %2 = vector.multi_reduction <add>, %1, %cst [1] : vector<8x8x256xf32> to vector<8x256xf32>
    %3 = vector.extract_strided_slice %2 {offsets = [0, 0], sizes = [8, 128], strides = [1, 1]} : vector<8x256xf32> to vector<8x128xf32>
    %4 = vector.extract_strided_slice %2 {offsets = [0, 128], sizes = [8, 128], strides = [1, 1]} : vector<8x256xf32> to vector<8x128xf32>
    %5 = arith.subf %3, %4 : vector<8x128xf32>
    %6 = math.absf %5 : vector<8x128xf32>
    %7 = arith.mulf %3, %4 : vector<8x128xf32>
    %8 = tpu.concatenate %6, %7 in 1 : vector<8x128xf32>, vector<8x128xf32> -> vector<8x256xf32>
    %9 = arith.truncf %2 : vector<8x256xf32> to vector<8x256xbf16>
    %c0_2 = arith.constant 0 : index
    %c0_3 = arith.constant 0 : index
    %c0_4 = arith.constant 0 : index
    %10 = vector.load %arg2[%c0_2, %c0_3, %c0_4] : memref<2x256x128xbf16, #tpu.memory_space<vmem>>, vector<1x256x128xbf16>
    %11 = vector.shape_cast %10 : vector<1x256x128xbf16> to vector<256x128xbf16>
    %cst_5 = arith.constant dense<0.000000e+00> : vector<8x128xf32>
    %12 = tpu.matmul %9, %11, %cst_5 {dimension_numbers = #tpu.dot_dimension_numbers<[1], [0], [0], [1], [0, 0, 1, 1], [], []>} : vector<8x256xbf16>, vector<256x128xbf16>, vector<8x128xf32> -> vector<8x128xf32>
    %13 = arith.truncf %8 : vector<8x256xf32> to vector<8x256xbf16>
    %c1 = arith.constant 1 : index
    %c0_6 = arith.constant 0 : index
    %c0_7 = arith.constant 0 : index
    %14 = vector.load %arg2[%c1, %c0_6, %c0_7] : memref<2x256x128xbf16, #tpu.memory_space<vmem>>, vector<1x256x128xbf16>
    %15 = vector.shape_cast %14 : vector<1x256x128xbf16> to vector<256x128xbf16>
    %cst_8 = arith.constant dense<0.000000e+00> : vector<8x128xf32>
    %16 = tpu.matmul %13, %15, %cst_8 {dimension_numbers = #tpu.dot_dimension_numbers<[1], [0], [0], [1], [0, 0, 1, 1], [], []>} : vector<8x256xbf16>, vector<256x128xbf16>, vector<8x128xf32> -> vector<8x128xf32>
    %17 = arith.addf %12, %16 : vector<8x128xf32>
    %c0_9 = arith.constant 0 : index
    %c0_10 = arith.constant 0 : index
    %18 = vector.load %arg3[%c0_9, %c0_10] : memref<1x128xf32, #tpu.memory_space<vmem>>, vector<1x128xf32>
    %19 = vector.broadcast %18 : vector<1x128xf32> to vector<8x128xf32>
    %20 = arith.addf %17, %19 : vector<8x128xf32>
    %c0_11 = arith.constant 0 : index
    %c0_12 = arith.constant 0 : index
    %21 = vector.load %arg4[%c0_11, %c0_12] : memref<8x128xf32, #tpu.memory_space<vmem>>, vector<8x128xf32>
    tpu.vector_store %arg4[%c0_11, %c0_12], %20 {strides = array<i32>} : memref<8x128xf32, #tpu.memory_space<vmem>>, vector<8x128xf32>,
    return
  }
  func.func @transform_0(%arg0: i32) -> (i32, i32, i32) {
    %c0_i32 = arith.constant 0 : i32
    %c0_i32_0 = arith.constant 0 : i32
    %c0_i32_1 = arith.constant 0 : i32
    return %arg0, %c0_i32, %c0_i32_0 : i32, i32, i32
  }
  func.func @transform_1(%arg0: i32) -> (i32, i32, i32) {
    %c0_i32 = arith.constant 0 : i32
    %c0_i32_0 = arith.constant 0 : i32
    %c0_i32_1 = arith.constant 0 : i32
    %c0_i32_2 = arith.constant 0 : i32
    return %c0_i32, %c0_i32_0, %c0_i32_1 : i32, i32, i32
  }
  func.func @transform_2(%arg0: i32) -> (i32, i32) {
    %c0_i32 = arith.constant 0 : i32
    %c0_i32_0 = arith.constant 0 : i32
    %c0_i32_1 = arith.constant 0 : i32
    return %c0_i32, %c0_i32_0 : i32, i32
  }
  func.func @transform_3(%arg0: i32) -> (i32, i32) {
    %c0_i32 = arith.constant 0 : i32
    %c0_i32_0 = arith.constant 0 : i32
    return %arg0, %c0_i32 : i32, i32
  }
}

</mosaic_0001>

<llo_original>
// kernel: tpu_custom_call.1
$region0: #{tpu_custom_call.1}
  #allocation0 [shape = 'u32[]', space=smem, size = 0x4, offset = 0x4, fixed_abs, tag = 'smem constant byte address 0x4 - core index']
  #allocation1 [shape = 'u32[144,128]{1,0:T(1,128)}', space=vmem, size = 0x12000, scoped, tag = 'internal scratch']
  %s0 = inlined_call_operand.hbm [shape: bf16[8,8,256], index: 0, kind: input, shape index: {}]
  %s1 = inlined_call_operand.hbm [shape: bf16[2,256,128], index: 1, kind: input, shape index: {}]
  %s2 = inlined_call_operand.vmem [shape: f32[1,128], index: 2, kind: input, shape index: {}]
  %s3 = inlined_call_operand.hbm [shape: f32[8,128], index: 3, kind: output, shape index: {}]
  %s4 = sld [smem:[#allocation0]]
  $region30: #{tpu_custom_call.1} parent=0
    _
  %s6 = ssub.s32 1, %s4
  %s7 = scalar_select 0, %s6, %s4
  $region1: #{tpu_custom_call.1} parent=0
    #allocation2 [shape = 'u8[32768]{0}', space=vmem, size = 0x8000, scoped, tag = 'input window, operand 0, single buffered']
    #allocation3 [shape = 's32[1]{0}', space=sflag, size = 0x4, scoped, tag = 'scoped memory for tpu_custom_call.1']
    #allocation4 [shape = 's32[1]{0}', space=sflag, size = 0x4, scoped, tag = 'scoped memory for tpu_custom_call.1']
    #allocation5 [shape = 'u8[131072]{0}', space=vmem, size = 0x20000, scoped, tag = 'input window, operand 1, single buffered']
    #allocation6 [shape = 's32[1]{0}', space=sflag, size = 0x4, scoped, tag = 'scoped memory for tpu_custom_call.1']
    #allocation7 [shape = 'u8[4096]{0}', space=vmem, size = 0x1000, scoped, tag = 'output window, operand 0, single buffered']
    %8 = vsyncpa [#allocation3], 0
    %9 = vsyncpa [#allocation6], 0
    %10 = vsyncpa [#allocation4], 0
    // Predicated region
    $region2: #{tpu_custom_call.1} parent=1 // pred_check
      _
    $region3: #{tpu_custom_call.1} parent=1 // pred_check_branch
      %12 = sbr.rel (0) target = $region5
    $region4: #{tpu_custom_call.1} parent=1 // pred_region
      %s14 = ssub.s32 1024, 1024
      %15 = vsyncadd [#allocation3], %s14
      %s16 = sshll.u32 [#allocation2], 4
      %s17 = int_to_ptr.vmem [resolvable:$true] %s16
      %22 = dma.hbm_to_vmem [thread:$0]  %s0, 1024, %s17, [#allocation3], 128, 128, 8
    $region5: #{tpu_custom_call.1} parent=1 // pred_fallthru
      _
    // Predicated region
    $region6: #{tpu_custom_call.1} parent=1 // pred_check
      _
    $region7: #{tpu_custom_call.1} parent=1 // pred_check_branch
      %24 = sbr.rel (0) target = $region9
    $region8: #{tpu_custom_call.1} parent=1 // pred_region
      %s26 = ssub.s32 4096, 4096
      %27 = vsyncadd [#allocation6], %s26
      %s28 = sshll.u32 [#allocation5], 4
      %s29 = int_to_ptr.vmem [resolvable:$true] %s28
      %34 = dma.hbm_to_vmem [thread:$0]  %s1, 4096, %s29, [#allocation6], 64, 64, 4
    $region9: #{tpu_custom_call.1} parent=1 // pred_fallthru
      _
    // Predicated region
    $region10: #{tpu_custom_call.1} parent=1 // pred_check
      _
    $region11: #{tpu_custom_call.1} parent=1 // pred_check_branch
      %36 = sbr.rel (0) target = $region13
    $region12: #{tpu_custom_call.1} parent=1 // pred_region
      _
    $region13: #{tpu_custom_call.1} parent=1 // pred_fallthru
      _
    // Predicated region
    $region14: #{tpu_custom_call.1} parent=1 // pred_check
      _
    $region15: #{tpu_custom_call.1} parent=1 // pred_check_branch
      %38 = sbr.rel (0) target = $region17
    $region16: #{tpu_custom_call.1} parent=1 // pred_region
      %39 = dma.done [#allocation3], 1024
    $region17: #{tpu_custom_call.1} parent=1 // pred_fallthru
      _
    // Predicated region
    $region18: #{tpu_custom_call.1} parent=1 // pred_check
      _
    $region19: #{tpu_custom_call.1} parent=1 // pred_check_branch
      %41 = sbr.rel (0) target = $region21
    $region20: #{tpu_custom_call.1} parent=1 // pred_region
      %42 = dma.done [#allocation6], 4096
    $region21: #{tpu_custom_call.1} parent=1 // pred_fallthru
      _
    %v44 = vld [vmem:[#allocation2] sm:$0xff]
    %v45 = vld [vmem:[#allocation2 + $0x8] sm:$0xff]
    %v46 = vld [vmem:[#allocation2 + $0x10] sm:$0xff]
    %v47 = vld [vmem:[#allocation2 + $0x18] sm:$0xff]
    %v48 = vld [vmem:[#allocation2 + $0x20] sm:$0xff]
    %v49 = vld [vmem:[#allocation2 + $0x28] sm:$0xff]
    %v50 = vld [vmem:[#allocation2 + $0x30] sm:$0xff]
    %v51 = vld [vmem:[#allocation2 + $0x38] sm:$0xff]
    %v52 = vunpack.c.l.bf16 %v44
    %v53 = vunpack.c.h.bf16 %v44
    %v54 = vunpack.c.l.bf16 %v45
    %v55 = vunpack.c.h.bf16 %v45
    %v56 = vunpack.c.l.bf16 %v46
    %v57 = vunpack.c.h.bf16 %v46
    %v58 = vunpack.c.l.bf16 %v47
    %v59 = vunpack.c.h.bf16 %v47
    %v60 = vunpack.c.l.bf16 %v48
    %v61 = vunpack.c.h.bf16 %v48
    %v62 = vunpack.c.l.bf16 %v49
    %v63 = vunpack.c.h.bf16 %v49
    %v64 = vunpack.c.l.bf16 %v50
    %v65 = vunpack.c.h.bf16 %v50
    %v66 = vunpack.c.l.bf16 %v51
    %v67 = vunpack.c.h.bf16 %v51
    %v68 = vrot.slane %v52, 4
    %v69 = vadd.f32 %v52, %v68
    %v70 = vrot.slane %v69, 2
    %v71 = vadd.f32 %v69, %v70
    %v72 = vrot.slane %v71, 1
    %v73 = vadd.f32 %v71, %v72
    %v74 = vrot.slane %v53, 4
    %v75 = vadd.f32 %v53, %v74
    %v76 = vrot.slane %v75, 2
    %v77 = vadd.f32 %v75, %v76
    %v78 = vrot.slane %v77, 1
    %v79 = vadd.f32 %v77, %v78
    %v80 = vrot.slane %v54, 4
    %v81 = vadd.f32 %v54, %v80
    %v82 = vrot.slane %v81, 2
    %v83 = vadd.f32 %v81, %v82
    %v84 = vrot.slane %v83, 1
    %v85 = vadd.f32 %v83, %v84
    %v86 = vrot.slane %v55, 4
    %v87 = vadd.f32 %v55, %v86
    %v88 = vrot.slane %v87, 2
    %v89 = vadd.f32 %v87, %v88
    %v90 = vrot.slane %v89, 1
    %v91 = vadd.f32 %v89, %v90
    %v92 = vrot.slane %v56, 4
    %v93 = vadd.f32 %v56, %v92
    %v94 = vrot.slane %v93, 2
    %v95 = vadd.f32 %v93, %v94
    %v96 = vrot.slane %v95, 1
    %v97 = vadd.f32 %v95, %v96
    %v98 = vrot.slane %v57, 4
    %v99 = vadd.f32 %v57, %v98
    %v100 = vrot.slane %v99, 2
    %v101 = vadd.f32 %v99, %v100
    %v102 = vrot.slane %v101, 1
    %v103 = vadd.f32 %v101, %v102
    %v104 = vrot.slane %v58, 4
    %v105 = vadd.f32 %v58, %v104
    %v106 = vrot.slane %v105, 2
    %v107 = vadd.f32 %v105, %v106
    %v108 = vrot.slane %v107, 1
    %v109 = vadd.f32 %v107, %v108
    %v110 = vrot.slane %v59, 4
    %v111 = vadd.f32 %v59, %v110
    %v112 = vrot.slane %v111, 2
    %v113 = vadd.f32 %v111, %v112
    %v114 = vrot.slane %v113, 1
    %v115 = vadd.f32 %v113, %v114
    %v116 = vrot.slane %v60, 4
    %v117 = vadd.f32 %v60, %v116
    %v118 = vrot.slane %v117, 2
    %v119 = vadd.f32 %v117, %v118
    %v120 = vrot.slane %v119, 1
    %v121 = vadd.f32 %v119, %v120
    %v122 = vrot.slane %v61, 4
    %v123 = vadd.f32 %v61, %v122
    %v124 = vrot.slane %v123, 2
    %v125 = vadd.f32 %v123, %v124
    %v126 = vrot.slane %v125, 1
    %v127 = vadd.f32 %v125, %v126
    %v128 = vrot.slane %v62, 4
    %v129 = vadd.f32 %v62, %v128
    %v130 = vrot.slane %v129, 2
    %v131 = vadd.f32 %v129, %v130
    %v132 = vrot.slane %v131, 1
    %v133 = vadd.f32 %v131, %v132
    %v134 = vrot.slane %v63, 4
    %v135 = vadd.f32 %v63, %v134
    %v136 = vrot.slane %v135, 2
    %v137 = vadd.f32 %v135, %v136
    %v138 = vrot.slane %v137, 1
    %v139 = vadd.f32 %v137, %v138
    %v140 = vrot.slane %v64, 4
    %v141 = vadd.f32 %v64, %v140
    %v142 = vrot.slane %v141, 2
    %v143 = vadd.f32 %v141, %v142
    %v144 = vrot.slane %v143, 1
    %v145 = vadd.f32 %v143, %v144
    %v146 = vrot.slane %v65, 4
    %v147 = vadd.f32 %v65, %v146
    %v148 = vrot.slane %v147, 2
    %v149 = vadd.f32 %v147, %v148
    %v150 = vrot.slane %v149, 1
    %v151 = vadd.f32 %v149, %v150
    %v152 = vrot.slane %v66, 4
    %v153 = vadd.f32 %v66, %v152
    %v154 = vrot.slane %v153, 2
    %v155 = vadd.f32 %v153, %v154
    %v156 = vrot.slane %v155, 1
    %v157 = vadd.f32 %v155, %v156
    %v158 = vrot.slane %v67, 4
    %v159 = vadd.f32 %v67, %v158
    %v160 = vrot.slane %v159, 2
    %v161 = vadd.f32 %v159, %v160
    %v162 = vrot.slane %v161, 1
    %v163 = vadd.f32 %v161, %v162
    %v164 = vsub.f32 %v73, %v79
    %v165 = vsub.f32 %v85, %v91
    %v166 = vsub.f32 %v97, %v103
    %v167 = vsub.f32 %v109, %v115
    %v168 = vsub.f32 %v121, %v127
    %v169 = vsub.f32 %v133, %v139
    %v170 = vsub.f32 %v145, %v151
    %v171 = vsub.f32 %v157, %v163
    %v172 = vand.u32 2147483647, %v164
    %v173 = vand.u32 2147483647, %v165
    %v174 = vand.u32 2147483647, %v166
    %v175 = vand.u32 2147483647, %v167
    %v176 = vand.u32 2147483647, %v168
    %v177 = vand.u32 2147483647, %v169
    %v178 = vand.u32 2147483647, %v170
    %v179 = vand.u32 2147483647, %v171
    %v180 = vmul.f32 %v73, %v79
    %v181 = vmul.f32 %v85, %v91
    %v182 = vmul.f32 %v97, %v103
    %v183 = vmul.f32 %v109, %v115
    %v184 = vmul.f32 %v121, %v127
    %v185 = vmul.f32 %v133, %v139
    %v186 = vmul.f32 %v145, %v151
    %v187 = vmul.f32 %v157, %v163
    %vm196 = vcmask 1041409
    %v197 = vsel %vm196, %v173, %v172
    %vm198 = vcmask 1042434
    %v199 = vsel %vm198, %v174, %v197
    %vm200 = vcmask 1043459
    %v201 = vsel %vm200, %v175, %v199
    %vm202 = vcmask 1044484
    %v203 = vsel %vm202, %v176, %v201
    %vm204 = vcmask 1045509
    %v205 = vsel %vm204, %v177, %v203
    %vm206 = vcmask 1046534
    %v207 = vsel %vm206, %v178, %v205
    %vm208 = vcmask 1047559
    %v209 = vsel %vm208, %v179, %v207
    %v219 = vsel %vm196, %v181, %v180
    %v220 = vsel %vm198, %v182, %v219
    %v221 = vsel %vm200, %v183, %v220
    %v222 = vsel %vm202, %v184, %v221
    %v223 = vsel %vm204, %v185, %v222
    %v224 = vsel %vm206, %v186, %v223
    %v225 = vsel %vm208, %v187, %v224
    %v227 = vpack.c.bf16 %v73, %v73
    %v228 = vpack.c.bf16 %v79, %v79
    %v229 = vpack.c.bf16 %v85, %v85
    %v230 = vpack.c.bf16 %v91, %v91
    %v231 = vpack.c.bf16 %v97, %v97
    %v232 = vpack.c.bf16 %v103, %v103
    %v233 = vpack.c.bf16 %v109, %v109
    %v234 = vpack.c.bf16 %v115, %v115
    %v235 = vpack.c.bf16 %v121, %v121
    %v236 = vpack.c.bf16 %v127, %v127
    %v237 = vpack.c.bf16 %v133, %v133
    %v238 = vpack.c.bf16 %v139, %v139
    %v239 = vpack.c.bf16 %v145, %v145
    %v240 = vpack.c.bf16 %v151, %v151
    %v241 = vpack.c.bf16 %v157, %v157
    %v242 = vpack.c.bf16 %v163, %v163
    %v243 = vld [vmem:[#allocation5] sm:$0xf]
    %v244 = vld [vmem:[#allocation5 + $0x4] sm:$0xf]
    %v245 = vld [vmem:[#allocation5 + $0x8] sm:$0xf]
    %v246 = vld [vmem:[#allocation5 + $0xc] sm:$0xf]
    %v247 = vld [vmem:[#allocation5 + $0x10] sm:$0xf]
    %v248 = vld [vmem:[#allocation5 + $0x14] sm:$0xf]
    %v249 = vld [vmem:[#allocation5 + $0x18] sm:$0xf]
    %v250 = vld [vmem:[#allocation5 + $0x1c] sm:$0xf]
    %v251 = vld [vmem:[#allocation5 + $0x20] sm:$0xf]
    %v252 = vld [vmem:[#allocation5 + $0x24] sm:$0xf]
    %v253 = vld [vmem:[#allocation5 + $0x28] sm:$0xf]
    %v254 = vld [vmem:[#allocation5 + $0x2c] sm:$0xf]
    %v255 = vld [vmem:[#allocation5 + $0x30] sm:$0xf]
    %v256 = vld [vmem:[#allocation5 + $0x34] sm:$0xf]
    %v257 = vld [vmem:[#allocation5 + $0x38] sm:$0xf]
    %v258 = vld [vmem:[#allocation5 + $0x3c] sm:$0xf]
    %v259 = vld [vmem:[#allocation5 + $0x40] sm:$0xf]
    %v260 = vld [vmem:[#allocation5 + $0x44] sm:$0xf]
    %v261 = vld [vmem:[#allocation5 + $0x48] sm:$0xf]
    %v262 = vld [vmem:[#allocation5 + $0x4c] sm:$0xf]
    %v263 = vld [vmem:[#allocation5 + $0x50] sm:$0xf]
    %v264 = vld [vmem:[#allocation5 + $0x54] sm:$0xf]
    %v265 = vld [vmem:[#allocation5 + $0x58] sm:$0xf]
    %v266 = vld [vmem:[#allocation5 + $0x5c] sm:$0xf]
    %v267 = vld [vmem:[#allocation5 + $0x60] sm:$0xf]
    %v268 = vld [vmem:[#allocation5 + $0x64] sm:$0xf]
    %v269 = vld [vmem:[#allocation5 + $0x68] sm:$0xf]
    %v270 = vld [vmem:[#allocation5 + $0x6c] sm:$0xf]
    %v271 = vld [vmem:[#allocation5 + $0x70] sm:$0xf]
    %v272 = vld [vmem:[#allocation5 + $0x74] sm:$0xf]
    %v273 = vld [vmem:[#allocation5 + $0x78] sm:$0xf]
    %v274 = vld [vmem:[#allocation5 + $0x7c] sm:$0xf]
    %v275 = vpack.c.bf16 %v209, %v209
    %v276 = vpack.c.bf16 %v225, %v225
    %s277 = scalar_lea.vmem [#allocation5], 128
    %v278 = vld [vmem:[%s277] sm:$0xf]
    %v279 = vld [vmem:[%s277 + $0x4] sm:$0xf]
    %v280 = vld [vmem:[%s277 + $0x8] sm:$0xf]
    %v281 = vld [vmem:[%s277 + $0xc] sm:$0xf]
    %v282 = vld [vmem:[%s277 + $0x10] sm:$0xf]
    %v283 = vld [vmem:[%s277 + $0x14] sm:$0xf]
    %v284 = vld [vmem:[%s277 + $0x18] sm:$0xf]
    %v285 = vld [vmem:[%s277 + $0x1c] sm:$0xf]
    %v286 = vld [vmem:[%s277 + $0x20] sm:$0xf]
    %v287 = vld [vmem:[%s277 + $0x24] sm:$0xf]
    %v288 = vld [vmem:[%s277 + $0x28] sm:$0xf]
    %v289 = vld [vmem:[%s277 + $0x2c] sm:$0xf]
    %v290 = vld [vmem:[%s277 + $0x30] sm:$0xf]
    %v291 = vld [vmem:[%s277 + $0x34] sm:$0xf]
    %v292 = vld [vmem:[%s277 + $0x38] sm:$0xf]
    %v293 = vld [vmem:[%s277 + $0x3c] sm:$0xf]
    %v294 = vld [vmem:[%s277 + $0x40] sm:$0xf]
    %v295 = vld [vmem:[%s277 + $0x44] sm:$0xf]
    %v296 = vld [vmem:[%s277 + $0x48] sm:$0xf]
    %v297 = vld [vmem:[%s277 + $0x4c] sm:$0xf]
    %v298 = vld [vmem:[%s277 + $0x50] sm:$0xf]
    %v299 = vld [vmem:[%s277 + $0x54] sm:$0xf]
    %v300 = vld [vmem:[%s277 + $0x58] sm:$0xf]
    %v301 = vld [vmem:[%s277 + $0x5c] sm:$0xf]
    %v302 = vld [vmem:[%s277 + $0x60] sm:$0xf]
    %v303 = vld [vmem:[%s277 + $0x64] sm:$0xf]
    %v304 = vld [vmem:[%s277 + $0x68] sm:$0xf]
    %v305 = vld [vmem:[%s277 + $0x6c] sm:$0xf]
    %v306 = vld [vmem:[%s277 + $0x70] sm:$0xf]
    %v307 = vld [vmem:[%s277 + $0x74] sm:$0xf]
    %v308 = vld [vmem:[%s277 + $0x78] sm:$0xf]
    %v309 = vld [vmem:[%s277 + $0x7c] sm:$0xf]
    %v342 = vunpack.c.l.b16 %v278
    %v343 = vunpack.c.l.b16 %v279
    %v344 = vunpack.c.l.b16 %v280
    %v345 = vunpack.c.l.b16 %v281
    %v346 = vunpack.c.l.b16 %v282
    %v347 = vunpack.c.l.b16 %v283
    %v348 = vunpack.c.l.b16 %v284
    %v349 = vunpack.c.l.b16 %v285
    %v350 = vunpack.c.l.b16 %v286
    %v351 = vunpack.c.l.b16 %v287
    %v352 = vunpack.c.l.b16 %v288
    %v353 = vunpack.c.l.b16 %v289
    %v354 = vunpack.c.l.b16 %v290
    %v355 = vunpack.c.l.b16 %v291
    %v356 = vunpack.c.l.b16 %v292
    %v357 = vunpack.c.l.b16 %v293
    %v358 = vunpack.c.l.b16 %v294
    %v359 = vunpack.c.l.b16 %v295
    %v360 = vunpack.c.l.b16 %v296
    %v361 = vunpack.c.l.b16 %v297
    %v362 = vunpack.c.l.b16 %v298
    %v363 = vunpack.c.l.b16 %v299
    %v364 = vunpack.c.l.b16 %v300
    %v365 = vunpack.c.l.b16 %v301
    %v366 = vunpack.c.l.b16 %v302
    %v367 = vunpack.c.l.b16 %v303
    %v368 = vunpack.c.l.b16 %v304
    %v369 = vunpack.c.l.b16 %v305
    %v370 = vunpack.c.l.b16 %v306
    %v371 = vunpack.c.l.b16 %v307
    %v372 = vunpack.c.l.b16 %v308
    %v373 = vunpack.c.l.b16 %v309
    %v374 = vpack.c.b16 %v343, %v342
    %v375 = vpack.c.b16 %v345, %v344
    %v376 = vpack.c.b16 %v347, %v346
    %v377 = vpack.c.b16 %v349, %v348
    %v378 = vpack.c.b16 %v351, %v350
    %v379 = vpack.c.b16 %v353, %v352
    %v380 = vpack.c.b16 %v355, %v354
    %v381 = vpack.c.b16 %v357, %v356
    %v382 = vpack.c.b16 %v359, %v358
    %v383 = vpack.c.b16 %v361, %v360
    %v384 = vpack.c.b16 %v363, %v362
    %v385 = vpack.c.b16 %v365, %v364
    %v386 = vpack.c.b16 %v367, %v366
    %v387 = vpack.c.b16 %v369, %v368
    %v388 = vpack.c.b16 %v371, %v370
    %v389 = vpack.c.b16 %v373, %v372
    %406 = vmatprep.subr.bf16.mxu0 0
    %407 = vmatpush1.bf16.msra.mxu0 %v374
    %408 = vmatprep.subr.bf16.mxu0 0
    %409 = vmatpush1.bf16.msra.mxu0 %v375
    %410 = vmatprep.subr.bf16.mxu0 0
    %411 = vmatpush1.bf16.msra.mxu0 %v376
    %412 = vmatprep.subr.bf16.mxu0 0
    %413 = vmatpush1.bf16.msra.mxu0 %v377
    %414 = vmatprep.subr.bf16.mxu0 0
    %415 = vmatpush1.bf16.msra.mxu0 %v378
    %416 = vmatprep.subr.bf16.mxu0 0
    %417 = vmatpush1.bf16.msra.mxu0 %v379
    %418 = vmatprep.subr.bf16.mxu0 0
    %419 = vmatpush1.bf16.msra.mxu0 %v380
    %420 = vmatprep.subr.bf16.mxu0 0
    %421 = vmatpush1.bf16.msra.mxu0 %v381
    %422 = vmatprep.subr.bf16.mxu0 0
    %423 = vmatpush1.bf16.msra.mxu0 %v382
    %424 = vmatprep.subr.bf16.mxu0 0
    %425 = vmatpush1.bf16.msra.mxu0 %v383
    %426 = vmatprep.subr.bf16.mxu0 0
    %427 = vmatpush1.bf16.msra.mxu0 %v384
    %428 = vmatprep.subr.bf16.mxu0 0
    %429 = vmatpush1.bf16.msra.mxu0 %v385
    %430 = vmatprep.subr.bf16.mxu0 0
    %431 = vmatpush1.bf16.msra.mxu0 %v386
    %432 = vmatprep.subr.bf16.mxu0 0
    %433 = vmatpush1.bf16.msra.mxu0 %v387
    %434 = vmatprep.subr.bf16.mxu0 0
    %435 = vmatpush1.bf16.msra.mxu0 %v388
    %436 = vmatprep.subr.bf16.mxu0 0
    %437 = vmatpush1.bf16.msra.mxu0 %v389
    %438 = vmatprep.mubr.bf16.mxu0 %v276
    %439 = vmatmul.mubr.bf16.gmra.mrb[0].mxu0 %v275
    %v440 = vpop.f32.mrb[0].mxu0
    %v441 = vadd.f32 0.0, %v440
    %v442 = vpop.f32.mrb[0].mxu0
    %v443 = vpop.f32.mrb[0].mxu0
    %v444 = vpop.f32.mrb[0].mxu0
    %445 = vdwg.mxu0
    %v462 = vunpack.c.l.b16 %v227
    %v463 = vunpack.c.l.b16 %v228
    %v464 = vunpack.c.l.b16 %v229
    %v465 = vunpack.c.l.b16 %v230
    %v466 = vunpack.c.l.b16 %v231
    %v467 = vunpack.c.l.b16 %v232
    %v468 = vunpack.c.l.b16 %v233
    %v469 = vunpack.c.l.b16 %v234
    %v470 = vunpack.c.l.b16 %v235
    %v471 = vunpack.c.l.b16 %v236
    %v472 = vunpack.c.l.b16 %v237
    %v473 = vunpack.c.l.b16 %v238
    %v474 = vunpack.c.l.b16 %v239
    %v475 = vunpack.c.l.b16 %v240
    %v476 = vunpack.c.l.b16 %v241
    %v477 = vunpack.c.l.b16 %v242
    %v478 = vsel %vm196, %v464, %v462
    %v479 = vsel %vm198, %v466, %v478
    %v480 = vsel %vm200, %v468, %v479
    %v481 = vsel %vm202, %v470, %v480
    %v482 = vsel %vm204, %v472, %v481
    %v483 = vsel %vm206, %v474, %v482
    %v484 = vsel %vm208, %v476, %v483
    %v485 = vsel %vm196, %v465, %v463
    %v486 = vsel %vm198, %v467, %v485
    %v487 = vsel %vm200, %v469, %v486
    %v488 = vsel %vm202, %v471, %v487
    %v489 = vsel %vm204, %v473, %v488
    %v490 = vsel %vm206, %v475, %v489
    %v491 = vsel %vm208, %v477, %v490
    %v492 = vpack.c.b16 %v484, %v484
    %v493 = vpack.c.b16 %v491, %v491
    %v528 = vunpack.c.l.b16 %v243
    %v529 = vunpack.c.l.b16 %v244
    %v530 = vunpack.c.l.b16 %v245
    %v531 = vunpack.c.l.b16 %v246
    %v532 = vunpack.c.l.b16 %v247
    %v533 = vunpack.c.l.b16 %v248
    %v534 = vunpack.c.l.b16 %v249
    %v535 = vunpack.c.l.b16 %v250
    %v536 = vunpack.c.l.b16 %v251
    %v537 = vunpack.c.l.b16 %v252
    %v538 = vunpack.c.l.b16 %v253
    %v539 = vunpack.c.l.b16 %v254
    %v540 = vunpack.c.l.b16 %v255
    %v541 = vunpack.c.l.b16 %v256
    %v542 = vunpack.c.l.b16 %v257
    %v543 = vunpack.c.l.b16 %v258
    %v544 = vunpack.c.l.b16 %v259
    %v545 = vunpack.c.l.b16 %v260
    %v546 = vunpack.c.l.b16 %v261
    %v547 = vunpack.c.l.b16 %v262
    %v548 = vunpack.c.l.b16 %v263
    %v549 = vunpack.c.l.b16 %v264
    %v550 = vunpack.c.l.b16 %v265
    %v551 = vunpack.c.l.b16 %v266
    %v552 = vunpack.c.l.b16 %v267
    %v553 = vunpack.c.l.b16 %v268
    %v554 = vunpack.c.l.b16 %v269
    %v555 = vunpack.c.l.b16 %v270
    %v556 = vunpack.c.l.b16 %v271
    %v557 = vunpack.c.l.b16 %v272
    %v558 = vunpack.c.l.b16 %v273
    %v559 = vunpack.c.l.b16 %v274
    %v560 = vpack.c.b16 %v529, %v528
    %v561 = vpack.c.b16 %v531, %v530
    %v562 = vpack.c.b16 %v533, %v532
    %v563 = vpack.c.b16 %v535, %v534
    %v564 = vpack.c.b16 %v537, %v536
    %v565 = vpack.c.b16 %v539, %v538
    %v566 = vpack.c.b16 %v541, %v540
    %v567 = vpack.c.b16 %v543, %v542
    %v568 = vpack.c.b16 %v545, %v544
    %v569 = vpack.c.b16 %v547, %v546
    %v570 = vpack.c.b16 %v549, %v548
    %v571 = vpack.c.b16 %v551, %v550
    %v572 = vpack.c.b16 %v553, %v552
    %v573 = vpack.c.b16 %v555, %v554
    %v574 = vpack.c.b16 %v557, %v556
    %v575 = vpack.c.b16 %v559, %v558
    %592 = vmatprep.subr.bf16.mxu0 0
    %593 = vmatpush1.bf16.msra.mxu0 %v560
    %594 = vmatprep.subr.bf16.mxu0 0
    %595 = vmatpush1.bf16.msra.mxu0 %v561
    %596 = vmatprep.subr.bf16.mxu0 0
    %597 = vmatpush1.bf16.msra.mxu0 %v562
    %598 = vmatprep.subr.bf16.mxu0 0
    %599 = vmatpush1.bf16.msra.mxu0 %v563
    %600 = vmatprep.subr.bf16.mxu0 0
    %601 = vmatpush1.bf16.msra.mxu0 %v564
    %602 = vmatprep.subr.bf16.mxu0 0
    %603 = vmatpush1.bf16.msra.mxu0 %v565
    %604 = vmatprep.subr.bf16.mxu0 0
    %605 = vmatpush1.bf16.msra.mxu0 %v566
    %606 = vmatprep.subr.bf16.mxu0 0
    %607 = vmatpush1.bf16.msra.mxu0 %v567
    %608 = vmatprep.subr.bf16.mxu0 0
    %609 = vmatpush1.bf16.msra.mxu0 %v568
    %610 = vmatprep.subr.bf16.mxu0 0
    %611 = vmatpush1.bf16.msra.mxu0 %v569
    %612 = vmatprep.subr.bf16.mxu0 0
    %613 = vmatpush1.bf16.msra.mxu0 %v570
    %614 = vmatprep.subr.bf16.mxu0 0
    %615 = vmatpush1.bf16.msra.mxu0 %v571
    %616 = vmatprep.subr.bf16.mxu0 0
    %617 = vmatpush1.bf16.msra.mxu0 %v572
    %618 = vmatprep.subr.bf16.mxu0 0
    %619 = vmatpush1.bf16.msra.mxu0 %v573
    %620 = vmatprep.subr.bf16.mxu0 0
    %621 = vmatpush1.bf16.msra.mxu0 %v574
    %622 = vmatprep.subr.bf16.mxu0 0
    %623 = vmatpush1.bf16.msra.mxu0 %v575
    %624 = vmatprep.mubr.bf16.mxu0 %v493
    %625 = vmatmul.mubr.bf16.gmra.mrb[0].mxu0 %v492
    %v626 = vpop.f32.mrb[0].mxu0
    %v627 = vadd.f32 %v441, %v626
    %v628 = vpop.f32.mrb[0].mxu0
    %v629 = vpop.f32.mrb[0].mxu0
    %v630 = vpop.f32.mrb[0].mxu0
    %631 = vdwg.mxu0
    %v632 = vld [vmem:[%s2] sm:$0x1]
    %v634 = vlaneseq
    %v635 = vshrl.u32 %v634, 7
    %v636 = vsub.s32 0, %v635
    %v637 = vrot.slane %v632, %v636
    %v639 = vadd.f32 %v627, %v637
    %640 = vst [vmem:[#allocation7] sm:$0xff] %v639
    // Predicated region
    $region22: #{tpu_custom_call.1} parent=1 // pred_check
      _
    $region23: #{tpu_custom_call.1} parent=1 // pred_check_branch
      %642 = sbr.rel (0) target = $region25
    $region24: #{tpu_custom_call.1} parent=1 // pred_region
      %s644 = ssub.s32 128, 128
      %645 = vsyncadd [#allocation4], %s644
      %s647 = sshll.u32 [#allocation7], 4
      %s648 = int_to_ptr.vmem [resolvable:$true] %s647
      %650 = dma.vmem_to_hbm [thread:$0]  %s648, 128, %s3, [#allocation4]
    $region25: #{tpu_custom_call.1} parent=1 // pred_fallthru
      _
    // Predicated region
    $region26: #{tpu_custom_call.1} parent=1 // pred_check
      _
    $region27: #{tpu_custom_call.1} parent=1 // pred_check_branch
      %652 = sbr.rel (0) target = $region29
    $region28: #{tpu_custom_call.1} parent=1 // pred_region
      %653 = dma.done [#allocation4], 128
    $region29: #{tpu_custom_call.1} parent=1 // pred_fallthru
      _
    %654 = vsyncpa [#allocation3], 1
    %655 = vsyncpa [#allocation6], 1
    %656 = vsyncpa [#allocation4], 1

</llo_original>
